<compile_context>
chip_gen: v7x
topology: tpu7x:2x2x1
jax: 0.10.0
libtpu: 0.0.40
codegen_flags: <defaults>
</compile_context>

<pallas_src>
import functools

import jax
import jax.numpy as jnp
from jax.experimental import pallas as pl
from jax.experimental.pallas import tpu as pltpu


_VMEM_LIMIT = 32 * 1024 * 1024     # safe on all generations; per-gen tuning knob
_K1_BUDGET = 10 * 1024 * 1024      # kernel-1 per-step working-set target
_K2_BUDGET = 12 * 1024 * 1024      # kernel-2 per-step working-set target


def _largest_divisor_leq(n, cap, multiple=1):
    """Largest d with d | n, d <= cap, multiple | d (None if none exists)."""
    cap = min(cap, n)
    for d in range(cap, 0, -1):
        if n % d == 0 and d % multiple == 0:
            return d
    return None


# ----------------------------- Pallas kernels -----------------------------

def _focus_pool_gate_kernel(x_ref, wt_ref, b_ref, wfc_ref, bfc_ref, gate_ref,
                            *, w_img):
    """Fused Focus 1x1 conv (BN folded) + SiLU + global sum-pool (+ fc + sigmoid).

    x_ref:    (C, TL)    row tile of one image, flat spatial in the lane dim
                         (TL = TH*W, TH even -> whole 2x2 row pairs)
    wt_ref:   (4, C, C)  per-tap folded conv weight, wt[t, o, c]
    b_ref:    (C, 1)     folded BN bias
    wfc_ref:  (C, C)     fc weight with the 1/(Ho*Wo) mean folded in
    bfc_ref:  (C, 1)     fc bias
    gate_ref: (C, 1)     revisited output: channel sums while m < last,
                         per-image sigmoid gate after the last spatial step
    """
    m = pl.program_id(1)

    @pl.when(m == 0)
    def _init():
        gate_ref[...] = jnp.zeros_like(gate_ref)

    # bf16 MXU operands, f32 accumulation; all elementwise math stays f32.
    x_bf = x_ref[...].astype(jnp.bfloat16)                           # (C, TL)
    wt = wt_ref[...].astype(jnp.bfloat16)                            # (4, C, C)
    u0 = jnp.dot(wt[0], x_bf, preferred_element_type=jnp.float32)    # tap (di=0, dj=0)
    u1 = jnp.dot(wt[1], x_bf, preferred_element_type=jnp.float32)    # tap (di=1, dj=0)
    u2 = jnp.dot(wt[2], x_bf, preferred_element_type=jnp.float32)    # tap (di=0, dj=1)
    u3 = jnp.dot(wt[3], x_bf, preferred_element_type=jnp.float32)    # tap (di=1, dj=1)

    # Align every tap to the anchor p0 = (2i)*W + 2j of its 2x2 cell:
    #   s[:, p0] = u0[:, p0] + u2[:, p0+1] + u1[:, p0+W] + u3[:, p0+W+1] + bias
    row0 = u0 + jnp.roll(u2, -1, axis=1)        # contributions from input row 2i
    row1 = u1 + jnp.roll(u3, -1, axis=1)        # contributions from input row 2i+1
    s = row0 + jnp.roll(row1, -w_img, axis=1) + b_ref[...]
    y = s * jax.nn.sigmoid(s)                   # SiLU (f32, EUP)

    # Keep only valid anchors (even local row, even column); other lanes hold
    # finite garbage and are masked to 0 before the reduction.
    tl = x_ref.shape[-1]
    p = jax.lax.broadcasted_iota(jnp.int32, (1, tl), 1)
    anchor = jnp.logical_and(p % 2 == 0, p % (2 * w_img) < w_img)
    gate_ref[...] += jnp.sum(jnp.where(anchor, y, 0.0), axis=1, keepdims=True)

    @pl.when(m == pl.num_programs(1) - 1)
    def _finalize():
        pooled = gate_ref[...]                                       # spatial sums
        logits = jnp.dot(wfc_ref[...], pooled,
                         preferred_element_type=jnp.float32) + bfc_ref[...]
        gate_ref[...] = jax.nn.sigmoid(logits)                       # per-image gate


def _gate_mul_kernel(x_ref, g_ref, o_ref):
    """out = x * gate: per-channel broadcast over the flat-spatial lane dim."""
    o_ref[...] = (x_ref[...] * g_ref[...]).astype(o_ref.dtype)


# ------------------------------- forward ----------------------------------

def fa_forward(x_nchw, params, *, eps=1e-5):
    w_focus = params["focus_w"]                 # (C, 4C, 1, 1)
    gamma, beta, rmean, rvar = params["bn"]     # each (C,)
    w_fc, b_fc = params["fc"]                   # (C, C, 1, 1), (C,)

    N, C, H, W = x_nchw.shape
    assert H % 2 == 0 and W % 2 == 0, "Focus requires even spatial dims"
    Ho, Wo = H // 2, W // 2
    HW = H * W

    # ---- fold eval-mode BatchNorm into the Focus 1x1 conv ----
    inv_std = gamma / jnp.sqrt(rvar + eps)                       # (C,)
    wf = w_focus.reshape(C, 4 * C) * inv_std[:, None]            # (C_out, 4C)
    w_taps = wf.reshape(C, 4, C).transpose(1, 0, 2)              # (tap, C_out, C_in)
    b_bn = (beta - rmean * inv_std).reshape(C, 1)                # (C, 1)

    # ---- fold the 1/(Ho*Wo) mean of the avg-pool into the fc weight ----
    wfc = w_fc.reshape(C, C) / float(Ho * Wo)                    # (C_out, C_in)
    bfc = b_fc.reshape(C, 1)

    x_flat = x_nchw.reshape(N, C, HW)        # metadata-only (NCHW is contiguous)

    # ---- kernel 1: Focus conv + BN + SiLU + sum-pool + fc + sigmoid -> gate ----
    bytes_per_row = W * C * 50               # x dbl-buf f32 + bf16 copy + ~10 f32 temps
    th_cap = max(2, _K1_BUDGET // max(bytes_per_row, 1))
    TH = _largest_divisor_leq(H, th_cap, multiple=2) or 2        # even, divides H
    TL1 = TH * W

    gate = pl.pallas_call(
        functools.partial(_focus_pool_gate_kernel, w_img=W),
        out_shape=jax.ShapeDtypeStruct((N, C, 1), jnp.float32),
        grid=(N, H // TH),
        in_specs=[
            pl.BlockSpec((None, C, TL1), lambda n, m: (n, 0, m)),   # x row tile
            pl.BlockSpec((4, C, C), lambda n, m: (0, 0, 0)),        # resident weights
            pl.BlockSpec((C, 1), lambda n, m: (0, 0)),
            pl.BlockSpec((C, C), lambda n, m: (0, 0)),
            pl.BlockSpec((C, 1), lambda n, m: (0, 0)),
        ],
        out_specs=pl.BlockSpec((None, C, 1), lambda n, m: (n, 0, 0)),
        compiler_params=pltpu.CompilerParams(
            dimension_semantics=("parallel", "arbitrary"),
            vmem_limit_bytes=_VMEM_LIMIT),
    )(x_flat, w_taps, b_bn, wfc, bfc)

    # ---- kernel 2: lane-dense per-channel gating, NCHW-native ----
    tl2_cap = max(128, _K2_BUDGET // (16 * C))                   # in+out, dbl-buffered
    TL2 = (_largest_divisor_leq(HW, tl2_cap, multiple=128)
           or _largest_divisor_leq(HW, tl2_cap) or HW)

    out_flat = pl.pallas_call(
        _gate_mul_kernel,
        out_shape=jax.ShapeDtypeStruct((N, C, HW), x_nchw.dtype),
        grid=(N, HW // TL2),
        in_specs=[
            pl.BlockSpec((None, C, TL2), lambda n, r: (n, 0, r)),   # x tile
            pl.BlockSpec((None, C, 1), lambda n, r: (n, 0, 0)),     # per-image gate
        ],
        out_specs=pl.BlockSpec((None, C, TL2), lambda n, r: (n, 0, r)),
        compiler_params=pltpu.CompilerParams(
            dimension_semantics=("parallel", "parallel"),
            vmem_limit_bytes=_VMEM_LIMIT),
    )(x_flat, gate)

    return out_flat.reshape(N, C, H, W)


# ----------------------------- reference & params --------------------------

def fa_reference(x_nchw, params, *, eps=1e-5):
    """Plain-JAX reference matching the PyTorch FA forward (eval-mode BN)."""
    w_focus = params["focus_w"]
    gamma, beta, rmean, rvar = params["bn"]
    w_fc, b_fc = params["fc"]
    N, C, H, W = x_nchw.shape
    sd = jnp.concatenate([x_nchw[:, :, ::2, ::2], x_nchw[:, :, 1::2, ::2],
                          x_nchw[:, :, ::2, 1::2], x_nchw[:, :, 1::2, 1::2]], axis=1)
    y = jax.lax.conv_general_dilated(sd, w_focus, (1, 1), "VALID",
                                     dimension_numbers=("NCHW", "OIHW", "NCHW"))
    y = (y - rmean[None, :, None, None]) / jnp.sqrt(rvar + eps)[None, :, None, None]
    y = y * gamma[None, :, None, None] + beta[None, :, None, None]
    y = y * jax.nn.sigmoid(y)                                   # SiLU
    p = jnp.mean(y, axis=(2, 3))                                # AdaptiveAvgPool2d(1)
    logits = p @ w_fc.reshape(C, C).T + b_fc                    # 1x1 conv w/ bias
    gate = jax.nn.sigmoid(logits)[:, :, None, None]
    return x_nchw * gate


def init_params(key, cin, dtype=jnp.float32):
    """Deterministic synthetic parameters matching FA.__init__ shapes (eval BN)."""
    k1, k2, k3, k4, k5, k6, k7 = jax.random.split(key, 7)
    w_focus = jax.random.normal(k1, (cin, 4 * cin, 1, 1), dtype) * (4 * cin) ** -0.5
    gamma = 1.0 + 0.1 * jax.random.normal(k4, (cin,), dtype)
    beta = 0.1 * jax.random.normal(k5, (cin,), dtype)
    rmean = 0.1 * jax.random.normal(k6, (cin,), dtype)
    rvar = jax.random.uniform(k7, (cin,), dtype, 0.5, 1.5)
    w_fc = jax.random.normal(k2, (cin, cin, 1, 1), dtype) * cin ** -0.5
    b_fc = 0.1 * jax.random.normal(k3, (cin,), dtype)
    return {"focus_w": w_focus, "bn": (gamma, beta, rmean, rvar), "fc": (w_fc, b_fc)}


if __name__ == "__main__":
    key = jax.random.PRNGKey(0)
    kx, kp = jax.random.split(key)
    cin = 4
    x = jax.random.normal(kx, (2, cin, 16, 16), jnp.float32)
    params = init_params(kp, cin)

    y = jax.jit(fa_forward)(x, params)
    jax.block_until_ready(y)
    assert y.shape == x.shape, y.shape

    y_ref = fa_reference(x, params)
    err = float(jnp.max(jnp.abs(y - y_ref)))
    # bf16 MXU operands with f32 accumulation -> compare at a matching tolerance.
    assert err < 2e-2, f"mismatch vs reference: max |err| = {err}"

    print("KERNEL_OK")
</pallas_src>

<mosaic_0001>
module attributes {stable_mosaic.version = 11 : i64} {
  func.func @_gate_mul_kernel(%arg0: i32, %arg1: i32, %arg2: memref<1x4x256xf32, #tpu.memory_space<vmem>>, %arg3: memref<1x4x1xf32, #tpu.memory_space<vmem>>, %arg4: memref<1x4x256xf32, #tpu.memory_space<vmem>>) attributes {dimension_semantics = [#tpu.dimension_semantics<parallel>, #tpu.dimension_semantics<parallel>], iteration_bounds = array<i64: 2, 1>, scalar_prefetch = 0 : i64, scratch_operands = 0 : i64, tpu.core_type = #tpu.core_type<tc>, window_params = [{transform_indices = @transform_0, window_bounds = array<i64: 1, 4, 256>}, {transform_indices = @transform_1, window_bounds = array<i64: 1, 4, 1>}, {transform_indices = @transform_2, window_bounds = array<i64: 1, 4, 256>}]} {
    %c0 = arith.constant 0 : index
    %c0_0 = arith.constant 0 : index
    %c0_1 = arith.constant 0 : index
    %0 = vector.load %arg2[%c0, %c0_0, %c0_1] : memref<1x4x256xf32, #tpu.memory_space<vmem>>, vector<1x4x256xf32>
    %1 = vector.shape_cast %0 : vector<1x4x256xf32> to vector<4x256xf32>
    %c0_2 = arith.constant 0 : index
    %c0_3 = arith.constant 0 : index
    %c0_4 = arith.constant 0 : index
    %2 = vector.load %arg3[%c0_2, %c0_3, %c0_4] : memref<1x4x1xf32, #tpu.memory_space<vmem>>, vector<1x4x1xf32>
    %3 = vector.shape_cast %2 : vector<1x4x1xf32> to vector<4x1xf32>
    %4 = vector.broadcast %3 : vector<4x1xf32> to vector<4x256xf32>
    %5 = arith.mulf %1, %4 : vector<4x256xf32>
    %c0_5 = arith.constant 0 : index
    %c0_6 = arith.constant 0 : index
    %c0_7 = arith.constant 0 : index
    %6 = vector.load %arg4[%c0_5, %c0_6, %c0_7] : memref<1x4x256xf32, #tpu.memory_space<vmem>>, vector<1x4x256xf32>
    %7 = vector.shape_cast %6 : vector<1x4x256xf32> to vector<4x256xf32>
    %8 = vector.shape_cast %5 : vector<4x256xf32> to vector<1x4x256xf32>
    tpu.vector_store %arg4[%c0_5, %c0_6, %c0_7], %8 {strides = array<i32>} : memref<1x4x256xf32, #tpu.memory_space<vmem>>, vector<1x4x256xf32>,
    return
  }
  func.func @transform_0(%arg0: i32, %arg1: i32) -> (i32, i32, i32) {
    %c0_i32 = arith.constant 0 : i32
    %c0_i32_0 = arith.constant 0 : i32
    return %arg0, %c0_i32, %arg1 : i32, i32, i32
  }
  func.func @transform_1(%arg0: i32, %arg1: i32) -> (i32, i32, i32) {
    %c0_i32 = arith.constant 0 : i32
    %c0_i32_0 = arith.constant 0 : i32
    %c0_i32_1 = arith.constant 0 : i32
    return %arg0, %c0_i32, %c0_i32_0 : i32, i32, i32
  }
  func.func @transform_2(%arg0: i32, %arg1: i32) -> (i32, i32, i32) {
    %c0_i32 = arith.constant 0 : i32
    %c0_i32_0 = arith.constant 0 : i32
    return %arg0, %c0_i32, %arg1 : i32, i32, i32
  }
}

module attributes {stable_mosaic.version = 11 : i64} {
  func.func @_focus_pool_gate_kernel(%arg0: i32, %arg1: i32, %arg2: memref<1x4x256xf32, #tpu.memory_space<vmem>>, %arg3: memref<4x4x4xf32, #tpu.memory_space<vmem>>, %arg4: memref<4x1xf32, #tpu.memory_space<vmem>>, %arg5: memref<4x4xf32, #tpu.memory_space<vmem>>, %arg6: memref<4x1xf32, #tpu.memory_space<vmem>>, %arg7: memref<1x4x1xf32, #tpu.memory_space<vmem>>) attributes {dimension_semantics = [#tpu.dimension_semantics<parallel>, #tpu.dimension_semantics<arbitrary>], iteration_bounds = array<i64: 2, 1>, scalar_prefetch = 0 : i64, scratch_operands = 0 : i64, tpu.core_type = #tpu.core_type<tc>, window_params = [{transform_indices = @transform_0, window_bounds = array<i64: 1, 4, 256>}, {pipeline_mode = #tpu.pipeline_mode<synchronous>, transform_indices = @transform_1, window_bounds = array<i64: 4, 4, 4>}, {pipeline_mode = #tpu.pipeline_mode<synchronous>, transform_indices = @transform_2, window_bounds = array<i64: 4, 1>}, {pipeline_mode = #tpu.pipeline_mode<synchronous>, transform_indices = @transform_3, window_bounds = array<i64: 4, 4>}, {pipeline_mode = #tpu.pipeline_mode<synchronous>, transform_indices = @transform_4, window_bounds = array<i64: 4, 1>}, {transform_indices = @transform_5, window_bounds = array<i64: 1, 4, 1>}]} {
    %c0_i32 = arith.constant 0 : i32
    %0 = arith.cmpi eq, %arg1, %c0_i32 : i32
    %1 = arith.extui %0 : i1 to i32
    %c0_i32_0 = arith.constant 0 : i32
    %2 = arith.cmpi ne, %1, %c0_i32_0 : i32
    scf.if %2 {
      %cst_32 = arith.constant 0.000000e+00 : f32
      %94 = vector.broadcast %cst_32 : f32 to vector<4x1xf32>
      %c0_33 = arith.constant 0 : index
      %c0_34 = arith.constant 0 : index
      %c0_35 = arith.constant 0 : index
      %95 = vector.load %arg7[%c0_33, %c0_34, %c0_35] : memref<1x4x1xf32, #tpu.memory_space<vmem>>, vector<1x4x1xf32>
      %96 = vector.shape_cast %95 : vector<1x4x1xf32> to vector<4x1xf32>
      %97 = vector.shape_cast %94 : vector<4x1xf32> to vector<1x4x1xf32>
      tpu.vector_store %arg7[%c0_33, %c0_34, %c0_35], %97 {strides = array<i32>} : memref<1x4x1xf32, #tpu.memory_space<vmem>>, vector<1x4x1xf32>,
    } else {
    }
    %c0 = arith.constant 0 : index
    %c0_1 = arith.constant 0 : index
    %c0_2 = arith.constant 0 : index
    %3 = vector.load %arg2[%c0, %c0_1, %c0_2] : memref<1x4x256xf32, #tpu.memory_space<vmem>>, vector<1x4x256xf32>
    %4 = vector.shape_cast %3 : vector<1x4x256xf32> to vector<4x256xf32>
    %5 = arith.truncf %4 : vector<4x256xf32> to vector<4x256xbf16>
    %c0_3 = arith.constant 0 : index
    %c0_4 = arith.constant 0 : index
    %c0_5 = arith.constant 0 : index
    %6 = vector.load %arg3[%c0_3, %c0_4, %c0_5] : memref<4x4x4xf32, #tpu.memory_space<vmem>>, vector<4x4x4xf32>
    %7 = arith.truncf %6 : vector<4x4x4xf32> to vector<4x4x4xbf16>
    %8 = vector.extract_strided_slice %7 {offsets = [0, 0, 0], sizes = [1, 4, 4], strides = [1, 1, 1]} : vector<4x4x4xbf16> to vector<1x4x4xbf16>
    %9 = vector.shape_cast %8 : vector<1x4x4xbf16> to vector<4x4xbf16>
    %cst = arith.constant dense<0.000000e+00> : vector<4x256xf32>
    %10 = tpu.matmul %9, %5, %cst {dimension_numbers = #tpu.dot_dimension_numbers<[1], [0], [0], [1], [0, 0, 1, 1], [], []>} : vector<4x4xbf16>, vector<4x256xbf16>, vector<4x256xf32> -> vector<4x256xf32>
    %11 = vector.extract_strided_slice %7 {offsets = [1, 0, 0], sizes = [1, 4, 4], strides = [1, 1, 1]} : vector<4x4x4xbf16> to vector<1x4x4xbf16>
    %12 = vector.shape_cast %11 : vector<1x4x4xbf16> to vector<4x4xbf16>
    %cst_6 = arith.constant dense<0.000000e+00> : vector<4x256xf32>
    %13 = tpu.matmul %12, %5, %cst_6 {dimension_numbers = #tpu.dot_dimension_numbers<[1], [0], [0], [1], [0, 0, 1, 1], [], []>} : vector<4x4xbf16>, vector<4x256xbf16>, vector<4x256xf32> -> vector<4x256xf32>
    %14 = vector.extract_strided_slice %7 {offsets = [2, 0, 0], sizes = [1, 4, 4], strides = [1, 1, 1]} : vector<4x4x4xbf16> to vector<1x4x4xbf16>
    %15 = vector.shape_cast %14 : vector<1x4x4xbf16> to vector<4x4xbf16>
    %cst_7 = arith.constant dense<0.000000e+00> : vector<4x256xf32>
    %16 = tpu.matmul %15, %5, %cst_7 {dimension_numbers = #tpu.dot_dimension_numbers<[1], [0], [0], [1], [0, 0, 1, 1], [], []>} : vector<4x4xbf16>, vector<4x256xbf16>, vector<4x256xf32> -> vector<4x256xf32>
    %17 = vector.extract_strided_slice %7 {offsets = [3, 0, 0], sizes = [1, 4, 4], strides = [1, 1, 1]} : vector<4x4x4xbf16> to vector<1x4x4xbf16>
    %18 = vector.shape_cast %17 : vector<1x4x4xbf16> to vector<4x4xbf16>
    %cst_8 = arith.constant dense<0.000000e+00> : vector<4x256xf32>
    %19 = tpu.matmul %18, %5, %cst_8 {dimension_numbers = #tpu.dot_dimension_numbers<[1], [0], [0], [1], [0, 0, 1, 1], [], []>} : vector<4x4xbf16>, vector<4x256xbf16>, vector<4x256xf32> -> vector<4x256xf32>
    %20 = vector.extract_strided_slice %16 {offsets = [0, 1], sizes = [4, 255], strides = [1, 1]} : vector<4x256xf32> to vector<4x255xf32>
    %21 = vector.extract_strided_slice %16 {offsets = [0, 0], sizes = [4, 1], strides = [1, 1]} : vector<4x256xf32> to vector<4x1xf32>
    %22 = tpu.concatenate %20, %21 in 1 : vector<4x255xf32>, vector<4x1xf32> -> vector<4x256xf32>
    %23 = arith.addf %10, %22 : vector<4x256xf32>
    %24 = vector.extract_strided_slice %19 {offsets = [0, 1], sizes = [4, 255], strides = [1, 1]} : vector<4x256xf32> to vector<4x255xf32>
    %25 = vector.extract_strided_slice %19 {offsets = [0, 0], sizes = [4, 1], strides = [1, 1]} : vector<4x256xf32> to vector<4x1xf32>
    %26 = tpu.concatenate %24, %25 in 1 : vector<4x255xf32>, vector<4x1xf32> -> vector<4x256xf32>
    %27 = arith.addf %13, %26 : vector<4x256xf32>
    %28 = vector.extract_strided_slice %27 {offsets = [0, 16], sizes = [4, 240], strides = [1, 1]} : vector<4x256xf32> to vector<4x240xf32>
    %29 = vector.extract_strided_slice %27 {offsets = [0, 0], sizes = [4, 16], strides = [1, 1]} : vector<4x256xf32> to vector<4x16xf32>
    %30 = tpu.concatenate %28, %29 in 1 : vector<4x240xf32>, vector<4x16xf32> -> vector<4x256xf32>
    %31 = arith.addf %23, %30 : vector<4x256xf32>
    %c0_9 = arith.constant 0 : index
    %c0_10 = arith.constant 0 : index
    %32 = vector.load %arg4[%c0_9, %c0_10] : memref<4x1xf32, #tpu.memory_space<vmem>>, vector<4x1xf32>
    %33 = vector.broadcast %32 : vector<4x1xf32> to vector<4x256xf32>
    %34 = arith.addf %31, %33 : vector<4x256xf32>
    %35 = arith.negf %34 : vector<4x256xf32>
    %36 = math.exp %35 : vector<4x256xf32>
    %cst_11 = arith.constant 1.000000e+00 : f32
    %37 = vector.broadcast %cst_11 : f32 to vector<4x256xf32>
    %38 = arith.addf %37, %36 : vector<4x256xf32>
    %39 = arith.divf %37, %38 : vector<4x256xf32>
    %40 = arith.mulf %34, %39 : vector<4x256xf32>
    %41 = tpu.iota {dimensions = array<i32: 1>} : vector<1x256xi32>
    %c2_i32 = arith.constant 2 : i32
    %c0_i32_12 = arith.constant 0 : i32
    %42 = arith.cmpi eq, %c2_i32, %c0_i32_12 : i32
    %c1_i32 = arith.constant 1 : i32
    %43 = arith.select %42, %c1_i32, %c2_i32 : i32
    %44 = vector.broadcast %43 : i32 to vector<1x256xi32>
    %45 = arith.remsi %41, %44 : vector<1x256xi32>
    %c0_i32_13 = arith.constant 0 : i32
    %46 = vector.broadcast %c0_i32_13 : i32 to vector<1x256xi32>
    %47 = arith.cmpi ne, %45, %46 : vector<1x256xi32>
    %c0_i32_14 = arith.constant 0 : i32
    %48 = vector.broadcast %c0_i32_14 : i32 to vector<1x256xi32>
    %49 = arith.cmpi slt, %45, %48 : vector<1x256xi32>
    %c0_i32_15 = arith.constant 0 : i32
    %50 = arith.cmpi slt, %43, %c0_i32_15 : i32
    %51 = vector.broadcast %50 : i1 to vector<1x256xi1>
    %52 = vector.broadcast %51 : vector<1x256xi1> to vector<1x256xi1>
    %53 = arith.xori %49, %52 : vector<1x256xi1>
    %54 = arith.andi %53, %47 : vector<1x256xi1>
    %55 = vector.broadcast %43 : i32 to vector<1x256xi32>
    %56 = arith.addi %45, %55 : vector<1x256xi32>
    %57 = arith.select %54, %56, %45 : vector<1x256xi1>, vector<1x256xi32>
    %c0_i32_16 = arith.constant 0 : i32
    %58 = vector.broadcast %c0_i32_16 : i32 to vector<1x256xi32>
    %59 = arith.cmpi eq, %57, %58 : vector<1x256xi32>
    %c32_i32 = arith.constant 32 : i32
    %c0_i32_17 = arith.constant 0 : i32
    %60 = arith.cmpi eq, %c32_i32, %c0_i32_17 : i32
    %c1_i32_18 = arith.constant 1 : i32
    %61 = arith.select %60, %c1_i32_18, %c32_i32 : i32
    %62 = vector.broadcast %61 : i32 to vector<1x256xi32>
    %63 = arith.remsi %41, %62 : vector<1x256xi32>
    %c0_i32_19 = arith.constant 0 : i32
    %64 = vector.broadcast %c0_i32_19 : i32 to vector<1x256xi32>
    %65 = arith.cmpi ne, %63, %64 : vector<1x256xi32>
    %c0_i32_20 = arith.constant 0 : i32
    %66 = vector.broadcast %c0_i32_20 : i32 to vector<1x256xi32>
    %67 = arith.cmpi slt, %63, %66 : vector<1x256xi32>
    %c0_i32_21 = arith.constant 0 : i32
    %68 = arith.cmpi slt, %61, %c0_i32_21 : i32
    %69 = vector.broadcast %68 : i1 to vector<1x256xi1>
    %70 = vector.broadcast %69 : vector<1x256xi1> to vector<1x256xi1>
    %71 = arith.xori %67, %70 : vector<1x256xi1>
    %72 = arith.andi %71, %65 : vector<1x256xi1>
    %73 = vector.broadcast %61 : i32 to vector<1x256xi32>
    %74 = arith.addi %63, %73 : vector<1x256xi32>
    %75 = arith.select %72, %74, %63 : vector<1x256xi1>, vector<1x256xi32>
    %c16_i32 = arith.constant 16 : i32
    %76 = vector.broadcast %c16_i32 : i32 to vector<1x256xi32>
    %77 = arith.cmpi slt, %75, %76 : vector<1x256xi32>
    %78 = arith.andi %59, %77 : vector<1x256xi1>
    %c0_22 = arith.constant 0 : index
    %c0_23 = arith.constant 0 : index
    %c0_24 = arith.constant 0 : index
    %79 = vector.load %arg7[%c0_22, %c0_23, %c0_24] : memref<1x4x1xf32, #tpu.memory_space<vmem>>, vector<1x4x1xf32>
    %80 = vector.shape_cast %79 : vector<1x4x1xf32> to vector<4x1xf32>
    %cst_25 = arith.constant 0.000000e+00 : f32
    %81 = vector.shape_cast %78 : vector<1x256xi1> to vector<1x256xi1>
    %82 = vector.broadcast %81 : vector<1x256xi1> to vector<4x256xi1>
    %83 = vector.broadcast %cst_25 : f32 to vector<4x256xf32>
    %84 = arith.select %82, %40, %83 : vector<4x256xi1>, vector<4x256xf32>
    %cst_26 = arith.constant dense<0.000000e+00> : vector<4xf32>
    %85 = vector.multi_reduction <add>, %84, %cst_26 [1] : vector<4x256xf32> to vector<4xf32>
    %86 = vector.shape_cast %85 : vector<4xf32> to vector<4x1xf32>
    %87 = arith.addf %80, %86 : vector<4x1xf32>
    %c0_27 = arith.constant 0 : index
    %c0_28 = arith.constant 0 : index
    %c0_29 = arith.constant 0 : index
    %88 = vector.load %arg7[%c0_27, %c0_28, %c0_29] : memref<1x4x1xf32, #tpu.memory_space<vmem>>, vector<1x4x1xf32>
    %89 = vector.shape_cast %88 : vector<1x4x1xf32> to vector<4x1xf32>
    %90 = vector.shape_cast %87 : vector<4x1xf32> to vector<1x4x1xf32>
    tpu.vector_store %arg7[%c0_27, %c0_28, %c0_29], %90 {strides = array<i32>} : memref<1x4x1xf32, #tpu.memory_space<vmem>>, vector<1x4x1xf32>,
    %c0_i32_30 = arith.constant 0 : i32
    %91 = arith.cmpi eq, %arg1, %c0_i32_30 : i32
    %92 = arith.extui %91 : i1 to i32
    %c0_i32_31 = arith.constant 0 : i32
    %93 = arith.cmpi ne, %92, %c0_i32_31 : i32
    scf.if %93 {
      %c0_32 = arith.constant 0 : index
      %c0_33 = arith.constant 0 : index
      %c0_34 = arith.constant 0 : index
      %94 = vector.load %arg7[%c0_32, %c0_33, %c0_34] : memref<1x4x1xf32, #tpu.memory_space<vmem>>, vector<1x4x1xf32>
      %95 = vector.shape_cast %94 : vector<1x4x1xf32> to vector<4x1xf32>
      %c0_35 = arith.constant 0 : index
      %c0_36 = arith.constant 0 : index
      %96 = vector.load %arg5[%c0_35, %c0_36] : memref<4x4xf32, #tpu.memory_space<vmem>>, vector<4x4xf32>
      %cst_37 = arith.constant dense<0.000000e+00> : vector<4x1xf32>
      %97 = tpu.matmul %96, %95, %cst_37 {dimension_numbers = #tpu.dot_dimension_numbers<[1], [0], [0], [1], [0, 0, 1, 1], [], []>} : vector<4x4xf32>, vector<4x1xf32>, vector<4x1xf32> -> vector<4x1xf32>
      %c0_38 = arith.constant 0 : index
      %c0_39 = arith.constant 0 : index
      %98 = vector.load %arg6[%c0_38, %c0_39] : memref<4x1xf32, #tpu.memory_space<vmem>>, vector<4x1xf32>
      %99 = arith.addf %97, %98 : vector<4x1xf32>
      %100 = arith.negf %99 : vector<4x1xf32>
      %101 = math.exp %100 : vector<4x1xf32>
      %cst_40 = arith.constant 1.000000e+00 : f32
      %102 = vector.broadcast %cst_40 : f32 to vector<4x1xf32>
      %103 = arith.addf %102, %101 : vector<4x1xf32>
      %104 = arith.divf %102, %103 : vector<4x1xf32>
      %c0_41 = arith.constant 0 : index
      %c0_42 = arith.constant 0 : index
      %c0_43 = arith.constant 0 : index
      %105 = vector.load %arg7[%c0_41, %c0_42, %c0_43] : memref<1x4x1xf32, #tpu.memory_space<vmem>>, vector<1x4x1xf32>
      %106 = vector.shape_cast %105 : vector<1x4x1xf32> to vector<4x1xf32>
      %107 = vector.shape_cast %104 : vector<4x1xf32> to vector<1x4x1xf32>
      tpu.vector_store %arg7[%c0_41, %c0_42, %c0_43], %107 {strides = array<i32>} : memref<1x4x1xf32, #tpu.memory_space<vmem>>, vector<1x4x1xf32>,
    } else {
    }
    return
  }
  func.func @transform_0(%arg0: i32, %arg1: i32) -> (i32, i32, i32) {
    %c0_i32 = arith.constant 0 : i32
    %c0_i32_0 = arith.constant 0 : i32
    return %arg0, %c0_i32, %arg1 : i32, i32, i32
  }
  func.func @transform_1(%arg0: i32, %arg1: i32) -> (i32, i32, i32) {
    %c0_i32 = arith.constant 0 : i32
    %c0_i32_0 = arith.constant 0 : i32
    %c0_i32_1 = arith.constant 0 : i32
    %c0_i32_2 = arith.constant 0 : i32
    return %c0_i32, %c0_i32_0, %c0_i32_1 : i32, i32, i32
  }
  func.func @transform_2(%arg0: i32, %arg1: i32) -> (i32, i32) {
    %c0_i32 = arith.constant 0 : i32
    %c0_i32_0 = arith.constant 0 : i32
    %c0_i32_1 = arith.constant 0 : i32
    return %c0_i32, %c0_i32_0 : i32, i32
  }
  func.func @transform_3(%arg0: i32, %arg1: i32) -> (i32, i32) {
    %c0_i32 = arith.constant 0 : i32
    %c0_i32_0 = arith.constant 0 : i32
    %c0_i32_1 = arith.constant 0 : i32
    return %c0_i32, %c0_i32_0 : i32, i32
  }
  func.func @transform_4(%arg0: i32, %arg1: i32) -> (i32, i32) {
    %c0_i32 = arith.constant 0 : i32
    %c0_i32_0 = arith.constant 0 : i32
    %c0_i32_1 = arith.constant 0 : i32
    return %c0_i32, %c0_i32_0 : i32, i32
  }
  func.func @transform_5(%arg0: i32, %arg1: i32) -> (i32, i32, i32) {
    %c0_i32 = arith.constant 0 : i32
    %c0_i32_0 = arith.constant 0 : i32
    %c0_i32_1 = arith.constant 0 : i32
    return %arg0, %c0_i32, %c0_i32_0 : i32, i32, i32
  }
}

</mosaic_0001>

<llo_original>
// kernel: fa_forward.3
$region0: #{fa_forward.3}
  #allocation0 [shape = 'u32[]', space=smem, size = 0x4, offset = 0x4, fixed_abs, tag = 'smem constant byte address 0x4 - core index']
  #allocation1 [shape = 'u32[144,128]{1,0:T(1,128)}', space=vmem, size = 0x12000, scoped, tag = 'internal scratch']
  %s0 = inlined_call_operand.vmem [shape: f32[2,4,256], index: 0, kind: input, shape index: {}]
  %s1 = inlined_call_operand.vmem [shape: f32[2,4,1], index: 1, kind: input, shape index: {}]
  %s2 = inlined_call_operand.vmem [shape: f32[2,4,256], index: 2, kind: output, shape index: {}]
  %s3 = sld [smem:[#allocation0]]
  $region41: #{fa_forward.3} parent=0
    _
  %s5 = ssub.s32 1, %s3
  %s6 = scalar_select 0, %s5, %s3
  loop: start=0, step=1, limit=4
  $region2: #{fa_forward.3} parent=0 // loop_pre_header
    _
  $region3: #{fa_forward.3} parent=0 // loop_header
    %s8 = sphi 0, %s12
    %p9 = scmp.ge.s32.totalorder %s8, 4
    %s15 = sphi 0, %s27
    %s16 = sphi 0, %s23
    %s17 = sphi 0, %s15
    %s18 = sphi 0, %s16
    %s19 = sphi 0, %s17
    %s20 = sphi 0, %s18
    %s32 = sphi 0, %s34
    %s35 = sphi 0, %s32
    %s36 = sphi 0, %s35
    %s52 = sphi 0, %s36
    %s58 = sphi 0, %s60
    %s61 = sphi 0, %s58
    %s62 = sphi 0, %s61
    %s78 = sphi 0, %s62
    %s86 = sphi 0, %s88
    %s89 = sphi 0, %s86
    %s90 = sphi 0, %s89
    %s106 = sphi 0, %s90
  $region4: #{fa_forward.3} parent=0 // loop_header_branch
    %11 = sbr.rel (%p9) target = $region8
  $region5: #{fa_forward.3} parent=0 // loop_body
    %s13 = ssub.s32 %s8, 1
    %s14 = ssub.s32 %s8, 2
    %s21 = sadd.s32 1, %s16
    %p22 = scmp.ge.s32.totalorder %s21, 1
    %s23 = scalar_select %p22, 0, %s21
    %s24 = sadd.s32 1, %s15
    %s25 = scalar_select %p22, %s24, %s15
    %p26 = scmp.ge.s32.totalorder %s25, 2
    %s27 = scalar_select %p26, 0, %s25
    %s28 = ssub.s32 %s15, %s27
    %s29 = ssub.s32 %s16, %s23
    %s30 = sor.u32 %s28, %s29
    %p31 = scmp.eq.s32.totalorder %s30, 0
    %s33 = sadd.s32 %s32, 1
    %s34 = scalar_select %p31, %s32, %s33
    %p37 = pneg %p31
    %p38 = scmp.eq.s32.totalorder %s8, 1
    %p39 = por %p37, %p38
    %p40 = scmp.ne.s32.totalorder %s32, %s35
    %p41 = scmp.eq.s32.totalorder %s8, 0
    %p42 = por %p40, %p41
    %p43 = scmp.ne.s32.totalorder %s32, %s35
    %p44 = scmp.eq.s32.totalorder %s13, 1
    %p45 = por %p43, %p44
    %p46 = scmp.ne.s32.totalorder %s35, %s36
    %p47 = scmp.eq.s32.totalorder %s13, 0
    %p48 = por %p46, %p47
    %p49 = scmp.ne.s32.totalorder %s35, %s36
    %p50 = scmp.eq.s32.totalorder %s14, 1
    %p51 = por %p49, %p50
    %p53 = scmp.ne.s32.totalorder %s36, %s52
    %p54 = scmp.eq.s32.totalorder %s14, 0
    %p55 = por %p53, %p54
    %s56 = ssub.s32 %s15, %s27
    %p57 = scmp.eq.s32.totalorder %s56, 0
    %s59 = sadd.s32 %s58, 1
    %s60 = scalar_select %p57, %s58, %s59
    %p63 = pneg %p57
    %p64 = scmp.eq.s32.totalorder %s8, 1
    %p65 = por %p63, %p64
    %p66 = scmp.ne.s32.totalorder %s58, %s61
    %p67 = scmp.eq.s32.totalorder %s8, 0
    %p68 = por %p66, %p67
    %p69 = scmp.ne.s32.totalorder %s58, %s61
    %p70 = scmp.eq.s32.totalorder %s13, 1
    %p71 = por %p69, %p70
    %p72 = scmp.ne.s32.totalorder %s61, %s62
    %p73 = scmp.eq.s32.totalorder %s13, 0
    %p74 = por %p72, %p73
    %p75 = scmp.ne.s32.totalorder %s61, %s62
    %p76 = scmp.eq.s32.totalorder %s14, 1
    %p77 = por %p75, %p76
    %p79 = scmp.ne.s32.totalorder %s62, %s78
    %p80 = scmp.eq.s32.totalorder %s14, 0
    %p81 = por %p79, %p80
    %s82 = ssub.s32 %s15, %s27
    %s83 = ssub.s32 %s16, %s23
    %s84 = sor.u32 %s82, %s83
    %p85 = scmp.eq.s32.totalorder %s84, 0
    %s87 = sadd.s32 %s86, 1
    %s88 = scalar_select %p85, %s86, %s87
    %p91 = pneg %p85
    %p92 = scmp.eq.s32.totalorder %s8, 1
    %p93 = por %p91, %p92
    %p94 = scmp.ne.s32.totalorder %s86, %s89
    %p95 = scmp.eq.s32.totalorder %s8, 0
    %p96 = por %p94, %p95
    %p97 = scmp.ne.s32.totalorder %s86, %s89
    %p98 = scmp.eq.s32.totalorder %s13, 1
    %p99 = por %p97, %p98
    %p100 = scmp.ne.s32.totalorder %s89, %s90
    %p101 = scmp.eq.s32.totalorder %s13, 0
    %p102 = por %p100, %p101
    %p103 = scmp.ne.s32.totalorder %s89, %s90
    %p104 = scmp.eq.s32.totalorder %s14, 1
    %p105 = por %p103, %p104
    %p107 = scmp.ne.s32.totalorder %s90, %s106
    %p108 = scmp.eq.s32.totalorder %s14, 0
    %p109 = por %p107, %p108
    %p110 = scmp.le.s32.totalorder 1, %s8
    %p111 = scmp.lt.s32.totalorder %s8, 3
    %p112 = pnand %p110, %p111
    %p113 = pneg %p112
    // Predicated region
    $region9: #{fa_forward.3} parent=5 // pred_check
      _
    $region10: #{fa_forward.3} parent=5 // pred_check_branch
      %115 = sbr.rel (%p112) target = $region12
    $region11: #{fa_forward.3} parent=5 // pred_region
      %s116 = ssub.s32 %s8, 1
    $region12: #{fa_forward.3} parent=5 // pred_fallthru
      _
    %p117 = scmp.lt.s32.totalorder %s8, 2
    // Predicated region
    $region13: #{fa_forward.3} parent=5 // pred_check
      %p118 = pneg %p117
    $region14: #{fa_forward.3} parent=5 // pred_check_branch
      %120 = sbr.rel (%p118) target = $region16
    $region15: #{fa_forward.3} parent=5 // pred_region
      // Predicated region
      $region17: #{fa_forward.3} parent=15 // pred_check
        %p121 = pneg %p42
      $region18: #{fa_forward.3} parent=15 // pred_check_branch
        %123 = sbr.rel (%p121) target = $region20
      $region19: #{fa_forward.3} parent=15 // pred_region
        %s124 = smul.u32 2, %s16
        %p125 = scmp.lt.s32.totalorder %s15, 1
        %s126 = scalar_select %p125, %s15, 1
        %p127 = scmp.lt.s32.totalorder %s124, 1
        %s128 = scalar_select %p127, %s124, 1
        %s129 = smul.addr %s126, 2
        %s130 = sadd.s32 %s128, %s129
        %s131 = smul.addr %s130, 4
        %s132 = scalar_lea.vmem %s0, %s131
        %s133 = smul.u32 2, %s16
      $region20: #{fa_forward.3} parent=15 // pred_fallthru
        _
      // Predicated region
      $region21: #{fa_forward.3} parent=15 // pred_check
        %p134 = pneg %p68
      $region22: #{fa_forward.3} parent=15 // pred_check_branch
        %136 = sbr.rel (%p134) target = $region24
      $region23: #{fa_forward.3} parent=15 // pred_region
        %p137 = scmp.lt.s32.totalorder %s15, 1
        %s138 = scalar_select %p137, %s15, 1
        %s139 = smul.addr %s138, 4
        %s140 = scalar_lea.vmem %s1, %s139
      $region24: #{fa_forward.3} parent=15 // pred_fallthru
        _
    $region16: #{fa_forward.3} parent=5 // pred_fallthru
      _
    %p141 = scmp.le.s32.totalorder 1, %s8
    %p142 = scmp.lt.s32.totalorder %s8, 3
    %p143 = pnand %p141, %p142
    %p144 = pneg %p143
    // Predicated region
    $region25: #{fa_forward.3} parent=5 // pred_check
      _
    $region26: #{fa_forward.3} parent=5 // pred_check_branch
      %146 = sbr.rel (%p143) target = $region28
    $region27: #{fa_forward.3} parent=5 // pred_region
      %s147 = ssub.s32 %s8, 1
      %s148 = smul.u32 2, %s18
      %p149 = scmp.lt.s32.totalorder %s17, 1
      %s150 = scalar_select %p149, %s17, 1
      %p151 = scmp.lt.s32.totalorder %s148, 1
      %s152 = scalar_select %p151, %s148, 1
      %s153 = smul.addr %s150, 2
      %s154 = sadd.s32 %s152, %s153
      %s155 = smul.addr %s154, 4
      %s156 = scalar_lea.vmem %s0, %s155
      %p157 = pneg %p48
      %p158 = pneg %p45
      %p159 = scmp.lt.s32.totalorder %s17, 1
      %s160 = scalar_select %p159, %s17, 1
      %s161 = smul.addr %s160, 4
      %s162 = scalar_lea.vmem %s1, %s161
      %p163 = pneg %p74
      %p164 = pneg %p71
      %p165 = pneg %p102
      %p166 = pneg %p99
      %s167 = smul.u32 2, %s18
      %p168 = scmp.lt.s32.totalorder %s17, 1
      %s169 = scalar_select %p168, %s17, 1
      %p170 = scmp.lt.s32.totalorder %s167, 1
      %s171 = scalar_select %p170, %s167, 1
      %s172 = smul.addr %s169, 2
      %s173 = sadd.s32 %s171, %s172
      %s174 = smul.addr %s173, 4
      %s175 = scalar_lea.vmem %s2, %s174
      %s176 = smul.u32 2, %s18
      %p177 = scmp.lt.s32.totalorder %s17, 1
      %s178 = scalar_select %p177, %s17, 1
      %p179 = scmp.lt.s32.totalorder %s176, 1
      %s180 = scalar_select %p179, %s176, 1
      %s181 = smul.addr %s178, 2
      %s182 = sadd.s32 %s180, %s181
      %s183 = smul.addr %s182, 4
      %s184 = scalar_lea.vmem %s0, %s183
      %s185 = smul.u32 2, %s18
      %p186 = scmp.lt.s32.totalorder %s17, 1
      %s187 = scalar_select %p186, %s17, 1
      %s188 = smul.addr %s187, 4
      %s189 = scalar_lea.vmem %s1, %s188
      %s190 = smul.u32 2, %s18
      %p191 = scmp.lt.s32.totalorder %s17, 1
      %s192 = scalar_select %p191, %s17, 1
      %p193 = scmp.lt.s32.totalorder %s190, 1
      %s194 = scalar_select %p193, %s190, 1
      %s195 = smul.addr %s192, 2
      %s196 = sadd.s32 %s194, %s195
      %s197 = smul.addr %s196, 4
      %s198 = scalar_lea.vmem %s2, %s197
      %s199 = smul.u32 2, %s18
      %v200 = vld [vmem:[%s184] sm:$0xff]
      %v201 = vld [vmem:[%s189] sm:$0xf]
      %203 = vset.pattern.permute.xlu0 0
      %204 = vperm.xlu0 %203, %v201
      %v205 = vpop.permute.xlu0 %204
      %v207 = vunpack.c.l.s4 839922192
      %v208 = vunpack.c.0.s8 %v207
      %v209 = vlaneseq
      %v210 = vshrl.u32 %v209, 7
      %v211 = vsub.s32 %v208, %v210
      %v212 = vrot.slane %v205, %v211
      %v214 = vmul.f32 %v200, %v212
      %215 = vst [vmem:[%s198] sm:$0xff] %v214
      %s216 = smul.u32 2, %s18
      %p217 = scmp.lt.s32.totalorder %s17, 1
      %s218 = scalar_select %p217, %s17, 1
      %p219 = scmp.lt.s32.totalorder %s216, 1
      %s220 = scalar_select %p219, %s216, 1
      %s221 = smul.addr %s218, 2
      %s222 = sadd.s32 %s220, %s221
      %s223 = smul.addr %s222, 4
      %s224 = scalar_lea.vmem %s2, %s223
      // Predicated region
      $region29: #{fa_forward.3} parent=27 // pred_check
        %p225 = pneg %p99
      $region30: #{fa_forward.3} parent=27 // pred_check_branch
        %227 = sbr.rel (%p225) target = $region32
      $region31: #{fa_forward.3} parent=27 // pred_region
        %s228 = smul.u32 2, %s18
      $region32: #{fa_forward.3} parent=27 // pred_fallthru
        _
    $region28: #{fa_forward.3} parent=5 // pred_fallthru
      _
    %p229 = scmp.le.s32.totalorder 2, %s8
    // Predicated region
    $region33: #{fa_forward.3} parent=5 // pred_check
      %p230 = pneg %p229
    $region34: #{fa_forward.3} parent=5 // pred_check_branch
      %232 = sbr.rel (%p230) target = $region36
    $region35: #{fa_forward.3} parent=5 // pred_region
      %s233 = ssub.s32 %s8, 2
      // Predicated region
      $region37: #{fa_forward.3} parent=35 // pred_check
        %p234 = pneg %p105
      $region38: #{fa_forward.3} parent=35 // pred_check_branch
        %236 = sbr.rel (%p234) target = $region40
      $region39: #{fa_forward.3} parent=35 // pred_region
        %s237 = smul.u32 2, %s20
        %p238 = scmp.lt.s32.totalorder %s19, 1
        %s239 = scalar_select %p238, %s19, 1
        %p240 = scmp.lt.s32.totalorder %s237, 1
        %s241 = scalar_select %p240, %s237, 1
        %s242 = smul.addr %s239, 2
        %s243 = sadd.s32 %s241, %s242
        %s244 = smul.addr %s243, 4
        %s245 = scalar_lea.vmem %s2, %s244
      $region40: #{fa_forward.3} parent=35 // pred_fallthru
        _
    $region36: #{fa_forward.3} parent=5 // pred_fallthru
      _
  $region6: #{fa_forward.3} parent=0 // loop_footer
    %s12 = sadd.s32 1, %s8
  $region7: #{fa_forward.3} parent=0 // loop_footer_branch
    %7 = sbr.rel target = $region3
  $region8: #{fa_forward.3} parent=0 // loop_exit
    _

// kernel: fa_forward.2
$region0: #{fa_forward.2}
  #allocation0 [shape = 'u32[]', space=smem, size = 0x4, offset = 0x4, fixed_abs, tag = 'smem constant byte address 0x4 - core index']
  #allocation1 [shape = 'u32[144,128]{1,0:T(1,128)}', space=vmem, size = 0x12000, scoped, tag = 'internal scratch']
  %s0 = inlined_call_operand.vmem [shape: f32[2,4,256], index: 0, kind: input, shape index: {}]
  %s1 = inlined_call_operand.vmem [shape: f32[4,4,4], index: 1, kind: input, shape index: {}]
  %s2 = inlined_call_operand.vmem [shape: f32[4,1], index: 2, kind: input, shape index: {}]
  %s3 = inlined_call_operand.vmem [shape: f32[4,4], index: 3, kind: input, shape index: {}]
  %s4 = inlined_call_operand.vmem [shape: f32[4,1], index: 4, kind: input, shape index: {}]
  %s5 = inlined_call_operand.vmem [shape: f32[2,4,1], index: 5, kind: output, shape index: {}]
  %s6 = sld [smem:[#allocation0]]
  $region61: #{fa_forward.2} parent=0
    _
  %s8 = ssub.s32 1, %s6
  %s9 = scalar_select 0, %s8, %s6
  loop: start=0, step=1, limit=4
  $region2: #{fa_forward.2} parent=0 // loop_pre_header
    _
  $region3: #{fa_forward.2} parent=0 // loop_header
    %s11 = sphi 0, %s15
    %p12 = scmp.ge.s32.totalorder %s11, 4
    %s18 = sphi 0, %s30
    %s19 = sphi 0, %s26
    %s20 = sphi 0, %s18
    %s21 = sphi 0, %s19
    %s22 = sphi 0, %s20
    %s23 = sphi 0, %s21
    %s35 = sphi 0, %s37
    %s38 = sphi 0, %s35
    %s39 = sphi 0, %s38
    %s55 = sphi 0, %s39
    %s59 = sphi 0, %s59
    %s61 = sphi 0, %s59
    %s62 = sphi 0, %s61
    %s76 = sphi 0, %s62
    %s80 = sphi 0, %s80
    %s82 = sphi 0, %s80
    %s83 = sphi 0, %s82
    %s97 = sphi 0, %s83
    %s101 = sphi 0, %s101
    %s103 = sphi 0, %s101
    %s104 = sphi 0, %s103
    %s118 = sphi 0, %s104
    %s122 = sphi 0, %s122
    %s124 = sphi 0, %s122
    %s125 = sphi 0, %s124
    %s139 = sphi 0, %s125
    %s145 = sphi 0, %s147
    %s148 = sphi 0, %s145
    %s149 = sphi 0, %s148
    %s165 = sphi 0, %s149
  $region4: #{fa_forward.2} parent=0 // loop_header_branch
    %14 = sbr.rel (%p12) target = $region8
  $region5: #{fa_forward.2} parent=0 // loop_body
    %s16 = ssub.s32 %s11, 1
    %s17 = ssub.s32 %s11, 2
    %s24 = sadd.s32 1, %s19
    %p25 = scmp.ge.s32.totalorder %s24, 1
    %s26 = scalar_select %p25, 0, %s24
    %s27 = sadd.s32 1, %s18
    %s28 = scalar_select %p25, %s27, %s18
    %p29 = scmp.ge.s32.totalorder %s28, 2
    %s30 = scalar_select %p29, 0, %s28
    %s31 = ssub.s32 %s18, %s30
    %s32 = ssub.s32 %s19, %s26
    %s33 = sor.u32 %s31, %s32
    %p34 = scmp.eq.s32.totalorder %s33, 0
    %s36 = sadd.s32 %s35, 1
    %s37 = scalar_select %p34, %s35, %s36
    %p40 = pneg %p34
    %p41 = scmp.eq.s32.totalorder %s11, 1
    %p42 = por %p40, %p41
    %p43 = scmp.ne.s32.totalorder %s35, %s38
    %p44 = scmp.eq.s32.totalorder %s11, 0
    %p45 = por %p43, %p44
    %p46 = scmp.ne.s32.totalorder %s35, %s38
    %p47 = scmp.eq.s32.totalorder %s16, 1
    %p48 = por %p46, %p47
    %p49 = scmp.ne.s32.totalorder %s38, %s39
    %p50 = scmp.eq.s32.totalorder %s16, 0
    %p51 = por %p49, %p50
    %p52 = scmp.ne.s32.totalorder %s38, %s39
    %p53 = scmp.eq.s32.totalorder %s17, 1
    %p54 = por %p52, %p53
    %p56 = scmp.ne.s32.totalorder %s39, %s55
    %p57 = scmp.eq.s32.totalorder %s17, 0
    %p58 = por %p56, %p57
    %s60 = sadd.s32 %s59, 1
    %p63 = scmp.eq.s32.totalorder %s11, 1
    %p64 = scmp.ne.s32.totalorder %s59, %s61
    %p65 = scmp.eq.s32.totalorder %s11, 0
    %p66 = por %p64, %p65
    %p67 = scmp.ne.s32.totalorder %s59, %s61
    %p68 = scmp.eq.s32.totalorder %s16, 1
    %p69 = por %p67, %p68
    %p70 = scmp.ne.s32.totalorder %s61, %s62
    %p71 = scmp.eq.s32.totalorder %s16, 0
    %p72 = por %p70, %p71
    %p73 = scmp.ne.s32.totalorder %s61, %s62
    %p74 = scmp.eq.s32.totalorder %s17, 1
    %p75 = por %p73, %p74
    %p77 = scmp.ne.s32.totalorder %s62, %s76
    %p78 = scmp.eq.s32.totalorder %s17, 0
    %p79 = por %p77, %p78
    %s81 = sadd.s32 %s80, 1
    %p84 = scmp.eq.s32.totalorder %s11, 1
    %p85 = scmp.ne.s32.totalorder %s80, %s82
    %p86 = scmp.eq.s32.totalorder %s11, 0
    %p87 = por %p85, %p86
    %p88 = scmp.ne.s32.totalorder %s80, %s82
    %p89 = scmp.eq.s32.totalorder %s16, 1
    %p90 = por %p88, %p89
    %p91 = scmp.ne.s32.totalorder %s82, %s83
    %p92 = scmp.eq.s32.totalorder %s16, 0
    %p93 = por %p91, %p92
    %p94 = scmp.ne.s32.totalorder %s82, %s83
    %p95 = scmp.eq.s32.totalorder %s17, 1
    %p96 = por %p94, %p95
    %p98 = scmp.ne.s32.totalorder %s83, %s97
    %p99 = scmp.eq.s32.totalorder %s17, 0
    %p100 = por %p98, %p99
    %s102 = sadd.s32 %s101, 1
    %p105 = scmp.eq.s32.totalorder %s11, 1
    %p106 = scmp.ne.s32.totalorder %s101, %s103
    %p107 = scmp.eq.s32.totalorder %s11, 0
    %p108 = por %p106, %p107
    %p109 = scmp.ne.s32.totalorder %s101, %s103
    %p110 = scmp.eq.s32.totalorder %s16, 1
    %p111 = por %p109, %p110
    %p112 = scmp.ne.s32.totalorder %s103, %s104
    %p113 = scmp.eq.s32.totalorder %s16, 0
    %p114 = por %p112, %p113
    %p115 = scmp.ne.s32.totalorder %s103, %s104
    %p116 = scmp.eq.s32.totalorder %s17, 1
    %p117 = por %p115, %p116
    %p119 = scmp.ne.s32.totalorder %s104, %s118
    %p120 = scmp.eq.s32.totalorder %s17, 0
    %p121 = por %p119, %p120
    %s123 = sadd.s32 %s122, 1
    %p126 = scmp.eq.s32.totalorder %s11, 1
    %p127 = scmp.ne.s32.totalorder %s122, %s124
    %p128 = scmp.eq.s32.totalorder %s11, 0
    %p129 = por %p127, %p128
    %p130 = scmp.ne.s32.totalorder %s122, %s124
    %p131 = scmp.eq.s32.totalorder %s16, 1
    %p132 = por %p130, %p131
    %p133 = scmp.ne.s32.totalorder %s124, %s125
    %p134 = scmp.eq.s32.totalorder %s16, 0
    %p135 = por %p133, %p134
    %p136 = scmp.ne.s32.totalorder %s124, %s125
    %p137 = scmp.eq.s32.totalorder %s17, 1
    %p138 = por %p136, %p137
    %p140 = scmp.ne.s32.totalorder %s125, %s139
    %p141 = scmp.eq.s32.totalorder %s17, 0
    %p142 = por %p140, %p141
    %s143 = ssub.s32 %s18, %s30
    %p144 = scmp.eq.s32.totalorder %s143, 0
    %s146 = sadd.s32 %s145, 1
    %s147 = scalar_select %p144, %s145, %s146
    %p150 = pneg %p144
    %p151 = scmp.eq.s32.totalorder %s11, 1
    %p152 = por %p150, %p151
    %p153 = scmp.ne.s32.totalorder %s145, %s148
    %p154 = scmp.eq.s32.totalorder %s11, 0
    %p155 = por %p153, %p154
    %p156 = scmp.ne.s32.totalorder %s145, %s148
    %p157 = scmp.eq.s32.totalorder %s16, 1
    %p158 = por %p156, %p157
    %p159 = scmp.ne.s32.totalorder %s148, %s149
    %p160 = scmp.eq.s32.totalorder %s16, 0
    %p161 = por %p159, %p160
    %p162 = scmp.ne.s32.totalorder %s148, %s149
    %p163 = scmp.eq.s32.totalorder %s17, 1
    %p164 = por %p162, %p163
    %p166 = scmp.ne.s32.totalorder %s149, %s165
    %p167 = scmp.eq.s32.totalorder %s17, 0
    %p168 = por %p166, %p167
    %p169 = scmp.le.s32.totalorder 1, %s11
    %p170 = scmp.lt.s32.totalorder %s11, 3
    %p171 = pnand %p169, %p170
    %p172 = pneg %p171
    // Predicated region
    $region9: #{fa_forward.2} parent=5 // pred_check
      _
    $region10: #{fa_forward.2} parent=5 // pred_check_branch
      %174 = sbr.rel (%p171) target = $region12
    $region11: #{fa_forward.2} parent=5 // pred_region
      %s175 = ssub.s32 %s11, 1
      // Predicated region
      $region13: #{fa_forward.2} parent=11 // pred_check
        %p176 = pneg %p72
      $region14: #{fa_forward.2} parent=11 // pred_check_branch
        %178 = sbr.rel (%p176) target = $region16
      $region15: #{fa_forward.2} parent=11 // pred_region
        _
      $region16: #{fa_forward.2} parent=11 // pred_fallthru
        _
      // Predicated region
      $region17: #{fa_forward.2} parent=11 // pred_check
        %p179 = pneg %p93
      $region18: #{fa_forward.2} parent=11 // pred_check_branch
        %181 = sbr.rel (%p179) target = $region20
      $region19: #{fa_forward.2} parent=11 // pred_region
        _
      $region20: #{fa_forward.2} parent=11 // pred_fallthru
        _
      // Predicated region
      $region21: #{fa_forward.2} parent=11 // pred_check
        %p182 = pneg %p114
      $region22: #{fa_forward.2} parent=11 // pred_check_branch
        %184 = sbr.rel (%p182) target = $region24
      $region23: #{fa_forward.2} parent=11 // pred_region
        _
      $region24: #{fa_forward.2} parent=11 // pred_fallthru
        _
      // Predicated region
      $region25: #{fa_forward.2} parent=11 // pred_check
        %p185 = pneg %p135
      $region26: #{fa_forward.2} parent=11 // pred_check_branch
        %187 = sbr.rel (%p185) target = $region28
      $region27: #{fa_forward.2} parent=11 // pred_region
        _
      $region28: #{fa_forward.2} parent=11 // pred_fallthru
        _
    $region12: #{fa_forward.2} parent=5 // pred_fallthru
      _
    %p188 = scmp.lt.s32.totalorder %s11, 2
    // Predicated region
    $region29: #{fa_forward.2} parent=5 // pred_check
      %p189 = pneg %p188
    $region30: #{fa_forward.2} parent=5 // pred_check_branch
      %191 = sbr.rel (%p189) target = $region32
    $region31: #{fa_forward.2} parent=5 // pred_region
      // Predicated region
      $region33: #{fa_forward.2} parent=31 // pred_check
        %p192 = pneg %p45
      $region34: #{fa_forward.2} parent=31 // pred_check_branch
        %194 = sbr.rel (%p192) target = $region36
      $region35: #{fa_forward.2} parent=31 // pred_region
        %s195 = smul.u32 2, %s19
        %p196 = scmp.lt.s32.totalorder %s18, 1
        %s197 = scalar_select %p196, %s18, 1
        %p198 = scmp.lt.s32.totalorder %s195, 1
        %s199 = scalar_select %p198, %s195, 1
        %s200 = smul.addr %s197, 2
        %s201 = sadd.s32 %s199, %s200
        %s202 = smul.addr %s201, 4
        %s203 = scalar_lea.vmem %s0, %s202
        %s204 = smul.u32 2, %s19
      $region36: #{fa_forward.2} parent=31 // pred_fallthru
        _
    $region32: #{fa_forward.2} parent=5 // pred_fallthru
      _
    %p205 = scmp.le.s32.totalorder 1, %s11
    %p206 = scmp.lt.s32.totalorder %s11, 3
    %p207 = pnand %p205, %p206
    %p208 = pneg %p207
    // Predicated region
    $region37: #{fa_forward.2} parent=5 // pred_check
      _
    $region38: #{fa_forward.2} parent=5 // pred_check_branch
      %210 = sbr.rel (%p207) target = $region40
    $region39: #{fa_forward.2} parent=5 // pred_region
      %s211 = ssub.s32 %s11, 1
      %s212 = smul.u32 2, %s21
      %p213 = scmp.lt.s32.totalorder %s20, 1
      %s214 = scalar_select %p213, %s20, 1
      %p215 = scmp.lt.s32.totalorder %s212, 1
      %s216 = scalar_select %p215, %s212, 1
      %s217 = smul.addr %s214, 2
      %s218 = sadd.s32 %s216, %s217
      %s219 = smul.addr %s218, 4
      %s220 = scalar_lea.vmem %s0, %s219
      %p221 = pneg %p51
      %p222 = pneg %p48
      %p223 = pneg %p72
      %p224 = pneg %p69
      %p225 = pneg %p93
      %p226 = pneg %p90
      %p227 = pneg %p114
      %p228 = pneg %p111
      %p229 = pneg %p135
      %p230 = pneg %p132
      %p231 = pneg %p161
      %p232 = pneg %p158
      %p233 = scmp.lt.s32.totalorder %s20, 1
      %s234 = scalar_select %p233, %s20, 1
      %s235 = smul.addr %s234, 4
      %s236 = scalar_lea.vmem %s5, %s235
      %s237 = smul.u32 2, %s21
      %p238 = scmp.lt.s32.totalorder %s20, 1
      %s239 = scalar_select %p238, %s20, 1
      %p240 = scmp.lt.s32.totalorder %s237, 1
      %s241 = scalar_select %p240, %s237, 1
      %s242 = smul.addr %s239, 2
      %s243 = sadd.s32 %s241, %s242
      %s244 = smul.addr %s243, 4
      %s245 = scalar_lea.vmem %s0, %s244
      %s246 = smul.u32 2, %s21
      %p247 = scmp.lt.s32.totalorder %s20, 1
      %s248 = scalar_select %p247, %s20, 1
      %s249 = smul.addr %s248, 4
      %s250 = scalar_lea.vmem %s5, %s249
      %p252 = scmp.eq.s32.totalorder %s21, 0
      // Predicated region
      $region41: #{fa_forward.2} parent=39 // pred_check
        %p253 = pneg %p252
      $region42: #{fa_forward.2} parent=39 // pred_check_branch
        %255 = sbr.rel (%p253) target = $region44
      $region43: #{fa_forward.2} parent=39 // pred_region
        %vm256 = vcmask 3072
        %257 = vst.msk [vmem:[%s250] sm:$0xf] %vm256, 0.0
      $region44: #{fa_forward.2} parent=39 // pred_fallthru
        _
      %v258 = vld [vmem:[%s245] sm:$0xff]
      %v260 = vcombine.high %v258, %v258
      %v262 = vpack.c.bf16 %v258, %v258
      %v263 = vpack.c.bf16 %v260, %v260
      %v264 = vld [vmem:[%s1] sm:$0xf]
      %v265 = vld [vmem:[%s1 + $0x4] sm:$0xf]
      %v266 = vld [vmem:[%s1 + $0x8] sm:$0xf]
      %v267 = vld [vmem:[%s1 + $0xc] sm:$0xf]
      %v268 = vpack.c.bf16 %v264, %v264
      %v269 = vpack.c.bf16 %v265, %v265
      %v270 = vpack.c.bf16 %v266, %v266
      %v271 = vpack.c.bf16 %v267, %v267
      %vm272 = vcmask 31744
      %v274 = vsel %vm272, %v270, 0
      %vm276 = vcmask 1041408
      %v278 = vsel %vm276, %v262, 0
      %v281 = vsel %vm276, %v263, 0
      %283 = vmatprep.subr.bf16.mxu0 %v281
      %284 = vmatpush1.bf16.msra.mxu0 %v278
      %285 = vmatprep.subr.bf16.mxu0 0
      %286 = vmatpush1.bf16.msra.mxu0 0
      %287 = vmatprep.subr.bf16.mxu0 0
      %288 = vmatpush1.bf16.msra.mxu0 0
      %289 = vmatprep.subr.bf16.mxu0 0
      %290 = vmatpush1.bf16.msra.mxu0 0
      %291 = vmatprep.subr.bf16.mxu0 0
      %292 = vmatpush1.bf16.msra.mxu0 0
      %293 = vmatprep.subr.bf16.mxu0 0
      %294 = vmatpush1.bf16.msra.mxu0 0
      %295 = vmatprep.subr.bf16.mxu0 0
      %296 = vmatpush1.bf16.msra.mxu0 0
      %297 = vmatprep.subr.bf16.mxu0 0
      %298 = vmatpush1.bf16.msra.mxu0 0
      %299 = vmatprep.subr.bf16.mxu0 0
      %300 = vmatpush1.bf16.msra.mxu0 0
      %301 = vmatprep.subr.bf16.mxu0 0
      %302 = vmatpush1.bf16.msra.mxu0 0
      %303 = vmatprep.subr.bf16.mxu0 0
      %304 = vmatpush1.bf16.msra.mxu0 0
      %305 = vmatprep.subr.bf16.mxu0 0
      %306 = vmatpush1.bf16.msra.mxu0 0
      %307 = vmatprep.subr.bf16.mxu0 0
      %308 = vmatpush1.bf16.msra.mxu0 0
      %309 = vmatprep.subr.bf16.mxu0 0
      %310 = vmatpush1.bf16.msra.mxu0 0
      %311 = vmatprep.subr.bf16.mxu0 0
      %312 = vmatpush1.bf16.msra.mxu0 0
      %313 = vmatprep.subr.bf16.mxu0 0
      %314 = vmatpush1.bf16.msra.mxu0 0
      %315 = vmatprep.mubr.bf16.mxu0 0
      %316 = vmatmul.mubr.bf16.gmra.mrb[0].mxu0 %v274
      %v317 = vpop.f32.mrb[0].mxu0
      %v318 = vadd.f32 0.0, %v317
      %v319 = vpop.f32.mrb[0].mxu0
      %v320 = vadd.f32 0.0, %v319
      %v321 = vpop.f32.mrb[0].mxu0
      %v322 = vpop.f32.mrb[0].mxu0
      %323 = vdwg.mxu0
      %v325 = vsel %vm272, %v271, 0
      %327 = vmatprep.subr.bf16.mxu0 %v281
      %328 = vmatpush1.bf16.msra.mxu0 %v278
      %329 = vmatprep.subr.bf16.mxu0 0
      %330 = vmatpush1.bf16.msra.mxu0 0
      %331 = vmatprep.subr.bf16.mxu0 0
      %332 = vmatpush1.bf16.msra.mxu0 0
      %333 = vmatprep.subr.bf16.mxu0 0
      %334 = vmatpush1.bf16.msra.mxu0 0
      %335 = vmatprep.subr.bf16.mxu0 0
      %336 = vmatpush1.bf16.msra.mxu0 0
      %337 = vmatprep.subr.bf16.mxu0 0
      %338 = vmatpush1.bf16.msra.mxu0 0
      %339 = vmatprep.subr.bf16.mxu0 0
      %340 = vmatpush1.bf16.msra.mxu0 0
      %341 = vmatprep.subr.bf16.mxu0 0
      %342 = vmatpush1.bf16.msra.mxu0 0
      %343 = vmatprep.subr.bf16.mxu0 0
      %344 = vmatpush1.bf16.msra.mxu0 0
      %345 = vmatprep.subr.bf16.mxu0 0
      %346 = vmatpush1.bf16.msra.mxu0 0
      %347 = vmatprep.subr.bf16.mxu0 0
      %348 = vmatpush1.bf16.msra.mxu0 0
      %349 = vmatprep.subr.bf16.mxu0 0
      %350 = vmatpush1.bf16.msra.mxu0 0
      %351 = vmatprep.subr.bf16.mxu0 0
      %352 = vmatpush1.bf16.msra.mxu0 0
      %353 = vmatprep.subr.bf16.mxu0 0
      %354 = vmatpush1.bf16.msra.mxu0 0
      %355 = vmatprep.subr.bf16.mxu0 0
      %356 = vmatpush1.bf16.msra.mxu0 0
      %357 = vmatprep.subr.bf16.mxu0 0
      %358 = vmatpush1.bf16.msra.mxu0 0
      %359 = vmatprep.mubr.bf16.mxu0 0
      %360 = vmatmul.mubr.bf16.gmra.mrb[0].mxu0 %v325
      %v361 = vpop.f32.mrb[0].mxu0
      %v362 = vadd.f32 0.0, %v361
      %v363 = vpop.f32.mrb[0].mxu0
      %v364 = vadd.f32 0.0, %v363
      %v365 = vpop.f32.mrb[0].mxu0
      %v366 = vpop.f32.mrb[0].mxu0
      %367 = vdwg.mxu0
      %370 = vrot.lane.b32.xlu0 %v318, 127
      %v371 = vpop.permute.xlu0 %370
      %372 = vrot.lane.b32.xlu0 %v320, 127
      %v373 = vpop.permute.xlu0 %372
      %vm374 = vcmask 1039360
      %v375 = vsel %vm374, %v371, %v373
      %v379 = vsel %vm374, %v373, %v371
      %v381 = vsel %vm272, %v268, 0
      %383 = vmatprep.subr.bf16.mxu0 %v281
      %384 = vmatpush1.bf16.msra.mxu0 %v278
      %385 = vmatprep.subr.bf16.mxu0 0
      %386 = vmatpush1.bf16.msra.mxu0 0
      %387 = vmatprep.subr.bf16.mxu0 0
      %388 = vmatpush1.bf16.msra.mxu0 0
      %389 = vmatprep.subr.bf16.mxu0 0
      %390 = vmatpush1.bf16.msra.mxu0 0
      %391 = vmatprep.subr.bf16.mxu0 0
      %392 = vmatpush1.bf16.msra.mxu0 0
      %393 = vmatprep.subr.bf16.mxu0 0
      %394 = vmatpush1.bf16.msra.mxu0 0
      %395 = vmatprep.subr.bf16.mxu0 0
      %396 = vmatpush1.bf16.msra.mxu0 0
      %397 = vmatprep.subr.bf16.mxu0 0
      %398 = vmatpush1.bf16.msra.mxu0 0
      %399 = vmatprep.subr.bf16.mxu0 0
      %400 = vmatpush1.bf16.msra.mxu0 0
      %401 = vmatprep.subr.bf16.mxu0 0
      %402 = vmatpush1.bf16.msra.mxu0 0
      %403 = vmatprep.subr.bf16.mxu0 0
      %404 = vmatpush1.bf16.msra.mxu0 0
      %405 = vmatprep.subr.bf16.mxu0 0
      %406 = vmatpush1.bf16.msra.mxu0 0
      %407 = vmatprep.subr.bf16.mxu0 0
      %408 = vmatpush1.bf16.msra.mxu0 0
      %409 = vmatprep.subr.bf16.mxu0 0
      %410 = vmatpush1.bf16.msra.mxu0 0
      %411 = vmatprep.subr.bf16.mxu0 0
      %412 = vmatpush1.bf16.msra.mxu0 0
      %413 = vmatprep.subr.bf16.mxu0 0
      %414 = vmatpush1.bf16.msra.mxu0 0
      %415 = vmatprep.mubr.bf16.mxu0 0
      %416 = vmatmul.mubr.bf16.gmra.mrb[0].mxu0 %v381
      %v417 = vpop.f32.mrb[0].mxu0
      %v418 = vadd.f32 %v375, %v417
      %v419 = vpop.f32.mrb[0].mxu0
      %v420 = vadd.f32 %v379, %v419
      %v421 = vpop.f32.mrb[0].mxu0
      %v422 = vpop.f32.mrb[0].mxu0
      %423 = vdwg.mxu0
      %426 = vrot.lane.b32.xlu0 %v362, 127
      %v427 = vpop.permute.xlu0 %426
      %428 = vrot.lane.b32.xlu0 %v364, 127
      %v429 = vpop.permute.xlu0 %428
      %v430 = vsel %vm374, %v427, %v429
      %v434 = vsel %vm374, %v429, %v427
      %v436 = vsel %vm272, %v269, 0
      %438 = vmatprep.subr.bf16.mxu0 %v281
      %439 = vmatpush1.bf16.msra.mxu0 %v278
      %440 = vmatprep.subr.bf16.mxu0 0
      %441 = vmatpush1.bf16.msra.mxu0 0
      %442 = vmatprep.subr.bf16.mxu0 0
      %443 = vmatpush1.bf16.msra.mxu0 0
      %444 = vmatprep.subr.bf16.mxu0 0
      %445 = vmatpush1.bf16.msra.mxu0 0
      %446 = vmatprep.subr.bf16.mxu0 0
      %447 = vmatpush1.bf16.msra.mxu0 0
      %448 = vmatprep.subr.bf16.mxu0 0
      %449 = vmatpush1.bf16.msra.mxu0 0
      %450 = vmatprep.subr.bf16.mxu0 0
      %451 = vmatpush1.bf16.msra.mxu0 0
      %452 = vmatprep.subr.bf16.mxu0 0
      %453 = vmatpush1.bf16.msra.mxu0 0
      %454 = vmatprep.subr.bf16.mxu0 0
      %455 = vmatpush1.bf16.msra.mxu0 0
      %456 = vmatprep.subr.bf16.mxu0 0
      %457 = vmatpush1.bf16.msra.mxu0 0
      %458 = vmatprep.subr.bf16.mxu0 0
      %459 = vmatpush1.bf16.msra.mxu0 0
      %460 = vmatprep.subr.bf16.mxu0 0
      %461 = vmatpush1.bf16.msra.mxu0 0
      %462 = vmatprep.subr.bf16.mxu0 0
      %463 = vmatpush1.bf16.msra.mxu0 0
      %464 = vmatprep.subr.bf16.mxu0 0
      %465 = vmatpush1.bf16.msra.mxu0 0
      %466 = vmatprep.subr.bf16.mxu0 0
      %467 = vmatpush1.bf16.msra.mxu0 0
      %468 = vmatprep.subr.bf16.mxu0 0
      %469 = vmatpush1.bf16.msra.mxu0 0
      %470 = vmatprep.mubr.bf16.mxu0 0
      %471 = vmatmul.mubr.bf16.gmra.mrb[0].mxu0 %v436
      %v472 = vpop.f32.mrb[0].mxu0
      %v473 = vadd.f32 %v430, %v472
      %v474 = vpop.f32.mrb[0].mxu0
      %v475 = vadd.f32 %v434, %v474
      %v476 = vpop.f32.mrb[0].mxu0
      %v477 = vpop.f32.mrb[0].mxu0
      %478 = vdwg.mxu0
      %481 = vrot.lane.b32.xlu0 %v473, 112
      %v482 = vpop.permute.xlu0 %481
      %483 = vrot.lane.b32.xlu0 %v475, 112
      %v484 = vpop.permute.xlu0 %483
      %vm485 = vcmask 916480
      %v486 = vsel %vm485, %v482, %v484
      %v490 = vsel %vm485, %v484, %v482
      %v491 = vadd.f32 %v418, %v486
      %v492 = vadd.f32 %v420, %v490
      %v493 = vld [vmem:[%s2] sm:$0xf]
      %495 = vset.pattern.permute.xlu0 0
      %496 = vperm.xlu0 %495, %v493
      %v497 = vpop.permute.xlu0 %496
      %v499 = vadd.f32 %v491, %v497
      %v500 = vadd.f32 %v492, %v497
      %v501 = vxor.u32 %v499, 2147483648
      %v502 = vxor.u32 %v500, 2147483648
      %v503 = vmul.f32 %v501, 1.442695
      %v504 = vpow.pop %v503
      %v505 = vmul.f32 %v502, 1.442695
      %v506 = vpow.pop %v505
      %v507 = vadd.f32 %v504, 1.0
      %v508 = vadd.f32 %v506, 1.0
      %v509 = vrcp.pop %v507
      %v510 = vmul.f32 1.0, %v509
      %v511 = vrcp.pop %v508
      %v512 = vmul.f32 1.0, %v511
      %v513 = vmul.f32 %v499, %v510
      %v514 = vmul.f32 %v500, %v512
      %v515 = vlaneseq
      %v516 = vand.u32 %v515, 127
      %v517 = vadd.s32 %v516, 128
      %vm518 = vcmp.lt.s32.totalorder %v516, 0
      %v519 = vsub.s32 0, %v516
      %v520 = vsel %vm518, %v519, %v516
      %v521 = vshrl.u32 %v520, 1
      %v522 = vand.u32 %v520, 1
      %v523 = vsub.s32 0, %v522
      %v524 = vsel %vm518, %v523, %v522
      %vm525 = vcmp.lt.s32.totalorder %v517, 0
      %v526 = vsub.s32 0, %v517
      %v527 = vsel %vm525, %v526, %v517
      %v528 = vshrl.u32 %v527, 1
      %v529 = vand.u32 %v527, 1
      %v530 = vsub.s32 0, %v529
      %v531 = vsel %vm525, %v530, %v529
      %vm532 = vcmp.ne.s32.totalorder %v524, 0
      %vm533 = vcmp.ne.s32.totalorder %v531, 0
      %vm534 = vcmp.lt.s32.totalorder %v524, 0
      %vm535 = vcmp.lt.s32.totalorder %v531, 0
      %vm536 = vmand %vm534, %vm532
      %vm537 = vmand %vm535, %vm533
      %v538 = vadd.s32 %v524, 2
      %v539 = vadd.s32 %v531, 2
      %v540 = vsel %vm536, %v538, %v524
      %v541 = vsel %vm537, %v539, %v531
      %vm542 = vcmp.eq.s32.totalorder %v540, 0
      %vm543 = vcmp.eq.s32.totalorder %v541, 0
      %vm544 = vcmp.lt.s32.totalorder %v516, 0
      %v545 = vsub.s32 0, %v516
      %v546 = vsel %vm544, %v545, %v516
      %v547 = vshrl.u32 %v546, 5
      %v548 = vand.u32 %v546, 31
      %v549 = vsub.s32 0, %v548
      %v550 = vsel %vm544, %v549, %v548
      %vm551 = vcmp.lt.s32.totalorder %v517, 0
      %v552 = vsub.s32 0, %v517
      %v553 = vsel %vm551, %v552, %v517
      %v554 = vshrl.u32 %v553, 5
      %v555 = vand.u32 %v553, 31
      %v556 = vsub.s32 0, %v555
      %v557 = vsel %vm551, %v556, %v555
      %vm558 = vcmp.ne.s32.totalorder %v550, 0
      %vm559 = vcmp.ne.s32.totalorder %v557, 0
      %vm560 = vcmp.lt.s32.totalorder %v550, 0
      %vm561 = vcmp.lt.s32.totalorder %v557, 0
      %vm562 = vmand %vm560, %vm558
      %vm563 = vmand %vm561, %vm559
      %v564 = vadd.s32 %v550, 32
      %v565 = vadd.s32 %v557, 32
      %v566 = vsel %vm562, %v564, %v550
      %v567 = vsel %vm563, %v565, %v557
      %vm568 = vcmp.lt.s32.totalorder %v566, 16
      %vm569 = vcmp.lt.s32.totalorder %v567, 16
      %vm570 = vmand %vm542, %vm568
      %vm571 = vmand %vm543, %vm569
      %v572 = vld [vmem:[%s250] sm:$0xf]
      %v573 = vsel %vm570, 1, 0
      %v574 = vsel %vm571, 1, 0
      %vm575 = vcmp.eq.s32.totalorder %v573, 1
      %vm576 = vcmp.eq.s32.totalorder %v574, 1
      %v577 = vsel %vm575, %v513, 0.0
      %v578 = vsel %vm576, %v514, 0.0
      %vm579 = vcmask 1043456
      %v580 = vsel %vm579, %v577, 0.0
      %v581 = vsel %vm579, %v578, 0.0
      %v582 = vadd.f32 %v580, %v581
      %583 = vadd.xlane.f32.xlu0 %v582
      %v584 = vpop.xlane.xlu0 %583
      %v585 = vadd.f32 %v572, %v584
      %vm586 = vcmask 3072
      %587 = vst.msk [vmem:[%s250] sm:$0xf] %vm586, %v585
      // Predicated region
      $region45: #{fa_forward.2} parent=39 // pred_check
        %p588 = pneg %p252
      $region46: #{fa_forward.2} parent=39 // pred_check_branch
        %590 = sbr.rel (%p588) target = $region48
      $region47: #{fa_forward.2} parent=39 // pred_region
        %v591 = vld [vmem:[%s250] sm:$0xf]
        %v592 = vld [vmem:[%s3] sm:$0xf]
        %v593 = vld [vmem:[%s4] sm:$0xf]
        %v595 = vsel %vm272, %v592, 0
        %v598 = vsel %vm579, %v591, 0
        %600 = vmatprep.subr.mxu0 0.0
        %601 = vmatpush1.msra.mxu0 %v598
        %602 = vmatprep.subr.mxu0 0.0
        %603 = vmatpush1.msra.mxu0 0.0
        %604 = vmatprep.subr.mxu0 0.0
        %605 = vmatpush1.msra.mxu0 0.0
        %606 = vmatprep.subr.mxu0 0.0
        %607 = vmatpush1.msra.mxu0 0.0
        %608 = vmatprep.subr.mxu0 0.0
        %609 = vmatpush1.msra.mxu0 0.0
        %610 = vmatprep.subr.mxu0 0.0
        %611 = vmatpush1.msra.mxu0 0.0
        %612 = vmatprep.subr.mxu0 0.0
        %613 = vmatpush1.msra.mxu0 0.0
        %614 = vmatprep.subr.mxu0 0.0
        %615 = vmatpush1.msra.mxu0 0.0
        %616 = vmatprep.subr.mxu0 0.0
        %617 = vmatpush1.msra.mxu0 0.0
        %618 = vmatprep.subr.mxu0 0.0
        %619 = vmatpush1.msra.mxu0 0.0
        %620 = vmatprep.subr.mxu0 0.0
        %621 = vmatpush1.msra.mxu0 0.0
        %622 = vmatprep.subr.mxu0 0.0
        %623 = vmatpush1.msra.mxu0 0.0
        %624 = vmatprep.subr.mxu0 0.0
        %625 = vmatpush1.msra.mxu0 0.0
        %626 = vmatprep.subr.mxu0 0.0
        %627 = vmatpush1.msra.mxu0 0.0
        %628 = vmatprep.subr.mxu0 0.0
        %629 = vmatpush1.msra.mxu0 0.0
        %630 = vmatprep.subr.mxu0 0.0
        %631 = vmatpush1.msra.mxu0 0.0
        %632 = vmatprep.subr.mxu0 0.0
        %633 = vmatpush1.msra.mxu0 0.0
        %634 = vmatprep.subr.mxu0 0.0
        %635 = vmatpush1.msra.mxu0 0.0
        %636 = vmatprep.subr.mxu0 0.0
        %637 = vmatpush1.msra.mxu0 0.0
        %638 = vmatprep.subr.mxu0 0.0
        %639 = vmatpush1.msra.mxu0 0.0
        %640 = vmatprep.subr.mxu0 0.0
        %641 = vmatpush1.msra.mxu0 0.0
        %642 = vmatprep.subr.mxu0 0.0
        %643 = vmatpush1.msra.mxu0 0.0
        %644 = vmatprep.subr.mxu0 0.0
        %645 = vmatpush1.msra.mxu0 0.0
        %646 = vmatprep.subr.mxu0 0.0
        %647 = vmatpush1.msra.mxu0 0.0
        %648 = vmatprep.subr.mxu0 0.0
        %649 = vmatpush1.msra.mxu0 0.0
        %650 = vmatprep.subr.mxu0 0.0
        %651 = vmatpush1.msra.mxu0 0.0
        %652 = vmatprep.subr.mxu0 0.0
        %653 = vmatpush1.msra.mxu0 0.0
        %654 = vmatprep.subr.mxu0 0.0
        %655 = vmatpush1.msra.mxu0 0.0
        %656 = vmatprep.subr.mxu0 0.0
        %657 = vmatpush1.msra.mxu0 0.0
        %658 = vmatprep.subr.mxu0 0.0
        %659 = vmatpush1.msra.mxu0 0.0
        %660 = vmatprep.subr.mxu0 0.0
        %661 = vmatpush1.msra.mxu0 0.0
        %662 = vmatprep.subr.mxu0 0.0
        %663 = vmatpush1.msra.mxu0 0.0
        %664 = vmatprep.mubr.f32.mxu0 0.0
        %665 = vmatmul.mubr.f32.gmra.mrb[0].mxu0 %v595
        %v666 = vpop.f32.mrb[0].mxu0
        %v667 = vadd.f32 %v593, %v666
        %v668 = vpop.f32.mrb[0].mxu0
        %669 = vdwg.mxu0
        %v670 = vxor.u32 %v667, 2147483648
        %v671 = vmul.f32 %v670, 1.442695
        %v672 = vpow.pop %v671
        %v673 = vadd.f32 %v672, 1.0
        %v674 = vrcp.pop %v673
        %v675 = vmul.f32 1.0, %v674
        %676 = vst.msk [vmem:[%s250] sm:$0xf] %vm586, %v675
      $region48: #{fa_forward.2} parent=39 // pred_fallthru
        _
      %p677 = scmp.lt.s32.totalorder %s20, 1
      %s678 = scalar_select %p677, %s20, 1
      %s679 = smul.addr %s678, 4
      %s680 = scalar_lea.vmem %s5, %s679
      // Predicated region
      $region49: #{fa_forward.2} parent=39 // pred_check
        %p681 = pneg %p158
      $region50: #{fa_forward.2} parent=39 // pred_check_branch
        %683 = sbr.rel (%p681) target = $region52
      $region51: #{fa_forward.2} parent=39 // pred_region
        _
      $region52: #{fa_forward.2} parent=39 // pred_fallthru
        _
    $region40: #{fa_forward.2} parent=5 // pred_fallthru
      _
    %p684 = scmp.le.s32.totalorder 2, %s11
    // Predicated region
    $region53: #{fa_forward.2} parent=5 // pred_check
      %p685 = pneg %p684
    $region54: #{fa_forward.2} parent=5 // pred_check_branch
      %687 = sbr.rel (%p685) target = $region56
    $region55: #{fa_forward.2} parent=5 // pred_region
      %s688 = ssub.s32 %s11, 2
      // Predicated region
      $region57: #{fa_forward.2} parent=55 // pred_check
        %p689 = pneg %p164
      $region58: #{fa_forward.2} parent=55 // pred_check_branch
        %691 = sbr.rel (%p689) target = $region60
      $region59: #{fa_forward.2} parent=55 // pred_region
        %p692 = scmp.lt.s32.totalorder %s22, 1
        %s693 = scalar_select %p692, %s22, 1
        %s694 = smul.addr %s693, 4
        %s695 = scalar_lea.vmem %s5, %s694
      $region60: #{fa_forward.2} parent=55 // pred_fallthru
        _
    $region56: #{fa_forward.2} parent=5 // pred_fallthru
      _
  $region6: #{fa_forward.2} parent=0 // loop_footer
    %s15 = sadd.s32 1, %s11
  $region7: #{fa_forward.2} parent=0 // loop_footer_branch
    %10 = sbr.rel target = $region3
  $region8: #{fa_forward.2} parent=0 // loop_exit
    _

</llo_original>
